<compile_context>
chip_gen: v7x
topology: tpu7x:2x2x1
jax: 0.10.0
libtpu: 0.0.40
codegen_flags: <defaults>
</compile_context>

<pallas_src>
import jax
import jax.numpy as jnp
from jax.experimental import pallas as pl
from jax.experimental.pallas import tpu as pltpu


def _attention_kernel(x_ref, wa_t_ref, b_ref, v_ref, mask_ref, ctx_ref, alpha_ref):
    """One grid step processes a block of BB batch elements.

    x_ref:     (BB, T, Dp)  biLSTM outputs (feature dim zero-padded to lane width)
    wa_t_ref:  (Dp, Dp)     Wa^T (optionally bf16 for v6e/v7x)
    b_ref:     (1, Dp)      Wa bias (f32)
    v_ref:     (1, Dp)      attention_v weight row (f32)
    mask_ref:  (BB, T)      key-padding mask as f32 (1.0 = masked, 0.0 = keep)
    ctx_ref:   (BB, Dp)     context vectors
    alpha_ref: (BB, T)      attention weights (lane-dense; reshaped outside)
    """
    BB, T, Dp = x_ref.shape

    x = x_ref[...]                                     # (BB, T, Dp)
    x2 = x.reshape(BB * T, Dp)                         # fold batch into MXU M dim

    # Projection on the MXU: (BB*T, Dp) @ (Dp, Dp), f32 accumulation.
    mu = jnp.tanh(
        jnp.dot(x2.astype(wa_t_ref.dtype), wa_t_ref[...],
                preferred_element_type=jnp.float32)
        + b_ref[...]
    )                                                  # (BB*T, Dp) f32

    # Score: VPU multiply + XLU lane reduction (avoids a 1-column MXU matvec
    # and the awkward (T, 1) intermediate layout).
    scores = jnp.sum(mu.reshape(BB, T, Dp) * v_ref[...], axis=-1)   # (BB, T)

    # Key-padding mask, same semantics as masked_fill(-inf).
    scores = jnp.where(mask_ref[...] > 0.5, -jnp.inf, scores)

    # Softmax over the sequence axis (lane axis), per batch row.
    m = jnp.max(scores, axis=-1, keepdims=True)
    e = jnp.exp(scores - m)
    alpha = e / jnp.sum(e, axis=-1, keepdims=True)                  # (BB, T) f32

    alpha_ref[...] = alpha.astype(alpha_ref.dtype)

    # Context: batched (1, T) @ (T, Dp) on the MXU (idle after the projection).
    ctx = jnp.einsum("bqt,btd->bqd", alpha[:, None, :],
                     x.astype(jnp.float32),
                     preferred_element_type=jnp.float32)            # (BB, 1, Dp)
    ctx_ref[...] = ctx[:, 0, :].astype(ctx_ref.dtype)


def attention_forward(x, Wa_weight, Wa_bias, v_weight, key_padding_mask=None,
                      *, use_bf16_matmul=False):
    """x: (B, T, D) float32.  Wa_weight: (D, D) (PyTorch nn.Linear layout: out, in).
    Wa_bias: (D,).  v_weight: (1, D).  key_padding_mask: optional (B, T) bool.

    use_bf16_matmul: cast the projection matmul inputs to bf16 (recommended on
    v6e/v7x for large D; keep False on v5e or when bit-accuracy vs f32 matters).
    """
    B, T, D = x.shape
    f32 = jnp.float32

    # Zero-pad the feature dim to the 128-lane width (inert for this pipeline).
    Dp = max(128, ((D + 127) // 128) * 128)

    # Block multiple batch elements per grid step so the projection gets a
    # full-height M tile (~256 rows) and per-step pipeline overhead amortizes.
    target_rows = 256
    bb = min(((B + 7) // 8) * 8,
             ((pl.cdiv(target_rows, T) + 7) // 8) * 8)
    bb = max(bb, 8)
    Bp = pl.cdiv(B, bb) * bb

    # Pad inputs (extra batch rows are all-zero, unmasked -> finite softmax,
    # sliced off afterwards).
    x_p = jnp.zeros((Bp, T, Dp), x.dtype).at[:B, :, :D].set(x)

    if key_padding_mask is None:
        mask_p = jnp.zeros((Bp, T), f32)
    else:
        mask_p = jnp.zeros((Bp, T), f32).at[:B].set(key_padding_mask.astype(f32))

    mm_dtype = jnp.bfloat16 if use_bf16_matmul else x.dtype
    wa_t = jnp.zeros((Dp, Dp), mm_dtype).at[:D, :D].set(Wa_weight.T.astype(mm_dtype))
    b2 = jnp.zeros((1, Dp), f32).at[:, :D].set(Wa_bias.reshape(1, D).astype(f32))
    v2 = jnp.zeros((1, Dp), f32).at[:, :D].set(v_weight.reshape(1, D).astype(f32))

    ctx_p, alpha_p = pl.pallas_call(
        _attention_kernel,
        out_shape=(
            jax.ShapeDtypeStruct((Bp, Dp), x.dtype),
            jax.ShapeDtypeStruct((Bp, T), x.dtype),
        ),
        grid_spec=pltpu.PrefetchScalarGridSpec(
            num_scalar_prefetch=0,
            grid=(Bp // bb,),
            in_specs=[
                pl.BlockSpec((bb, T, Dp), lambda i: (i, 0, 0)),  # x block
                pl.BlockSpec((Dp, Dp),    lambda i: (0, 0)),     # Wa^T
                pl.BlockSpec((1, Dp),     lambda i: (0, 0)),     # bias
                pl.BlockSpec((1, Dp),     lambda i: (0, 0)),     # v row
                pl.BlockSpec((bb, T),     lambda i: (i, 0)),     # mask (lane-dense)
            ],
            out_specs=[
                pl.BlockSpec((bb, Dp),    lambda i: (i, 0)),     # context
                pl.BlockSpec((bb, T),     lambda i: (i, 0)),     # alpha (lane-dense)
            ],
        ),
        compiler_params=pltpu.CompilerParams(
            dimension_semantics=("parallel",)),
    )(x_p, wa_t, b2, v2, mask_p)

    ctx = ctx_p[:B, :D]
    alpha = alpha_p[:B].reshape(B, T, 1)
    return ctx, alpha


def _reference(x, Wa_weight, Wa_bias, v_weight, key_padding_mask=None):
    mu = jnp.tanh(jnp.einsum("btd,od->bto", x, Wa_weight) + Wa_bias)
    scores = jnp.einsum("btd,od->bto", mu, v_weight)                 # (B, T, 1)
    if key_padding_mask is not None:
        scores = jnp.where(key_padding_mask[..., None], -jnp.inf, scores)
    alpha = jax.nn.softmax(scores, axis=1)
    ctx = jnp.sum(alpha * x, axis=1)
    return ctx, alpha


if __name__ == "__main__":
    lstm_units = 16
    D = lstm_units * 2          # lstm_output_dim
    B, T = 2, 8

    key = jax.random.PRNGKey(0)
    k_x, k_wa, k_b, k_v = jax.random.split(key, 4)

    # Deterministic "PyTorch-style" init: uniform(-1/sqrt(in), 1/sqrt(in))
    bound = 1.0 / jnp.sqrt(jnp.float32(D))
    x = jax.random.normal(k_x, (B, T, D), jnp.float32)
    Wa_weight = jax.random.uniform(k_wa, (D, D), jnp.float32, -bound, bound)
    Wa_bias = jax.random.uniform(k_b, (D,), jnp.float32, -bound, bound)
    v_weight = jax.random.uniform(k_v, (1, D), jnp.float32, -bound, bound)

    # Padding mask: mask out the last two timesteps of batch element 1.
    key_padding_mask = jnp.zeros((B, T), dtype=bool).at[1, -2:].set(True)

    # With mask
    ctx, alpha = attention_forward(x, Wa_weight, Wa_bias, v_weight, key_padding_mask)
    jax.block_until_ready((ctx, alpha))
    ctx_ref, alpha_ref = _reference(x, Wa_weight, Wa_bias, v_weight, key_padding_mask)
    assert ctx.shape == (B, D) and alpha.shape == (B, T, 1)
    assert jnp.allclose(ctx, ctx_ref, atol=1e-5, rtol=1e-5)
    assert jnp.allclose(alpha, alpha_ref, atol=1e-5, rtol=1e-5)

    # Without mask
    ctx2, alpha2 = attention_forward(x, Wa_weight, Wa_bias, v_weight, None)
    jax.block_until_ready((ctx2, alpha2))
    ctx_ref2, alpha_ref2 = _reference(x, Wa_weight, Wa_bias, v_weight, None)
    assert jnp.allclose(ctx2, ctx_ref2, atol=1e-5, rtol=1e-5)
    assert jnp.allclose(alpha2, alpha_ref2, atol=1e-5, rtol=1e-5)

    print("KERNEL_OK")
</pallas_src>

<mosaic_0001>
module attributes {stable_mosaic.version = 11 : i64} {
  func.func @_attention_kernel(%arg0: i32, %arg1: memref<8x8x128xf32, #tpu.memory_space<vmem>>, %arg2: memref<128x128xf32, #tpu.memory_space<vmem>>, %arg3: memref<1x128xf32, #tpu.memory_space<vmem>>, %arg4: memref<1x128xf32, #tpu.memory_space<vmem>>, %arg5: memref<8x8xf32, #tpu.memory_space<vmem>>, %arg6: memref<8x128xf32, #tpu.memory_space<vmem>>, %arg7: memref<8x8xf32, #tpu.memory_space<vmem>>) attributes {dimension_semantics = [#tpu.dimension_semantics<parallel>], iteration_bounds = array<i64: 1>, scalar_prefetch = 0 : i64, scratch_operands = 0 : i64, tpu.core_type = #tpu.core_type<tc>, window_params = [{transform_indices = @transform_0, window_bounds = array<i64: 8, 8, 128>}, {pipeline_mode = #tpu.pipeline_mode<synchronous>, transform_indices = @transform_1, window_bounds = array<i64: 128, 128>}, {pipeline_mode = #tpu.pipeline_mode<synchronous>, transform_indices = @transform_2, window_bounds = array<i64: 1, 128>}, {pipeline_mode = #tpu.pipeline_mode<synchronous>, transform_indices = @transform_3, window_bounds = array<i64: 1, 128>}, {transform_indices = @transform_4, window_bounds = array<i64: 8, 8>}, {transform_indices = @transform_5, window_bounds = array<i64: 8, 128>}, {transform_indices = @transform_6, window_bounds = array<i64: 8, 8>}]} {
    %c0 = arith.constant 0 : index
    %c0_0 = arith.constant 0 : index
    %c0_1 = arith.constant 0 : index
    %0 = vector.load %arg1[%c0, %c0_0, %c0_1] : memref<8x8x128xf32, #tpu.memory_space<vmem>>, vector<8x8x128xf32>
    %1 = vector.shape_cast %0 : vector<8x8x128xf32> to vector<64x128xf32>
    %c0_2 = arith.constant 0 : index
    %c0_3 = arith.constant 0 : index
    %2 = vector.load %arg2[%c0_2, %c0_3] : memref<128x128xf32, #tpu.memory_space<vmem>>, vector<128x128xf32>
    %cst = arith.constant dense<0.000000e+00> : vector<64x128xf32>
    %3 = tpu.matmul %1, %2, %cst {dimension_numbers = #tpu.dot_dimension_numbers<[1], [0], [0], [1], [0, 0, 1, 1], [], []>} : vector<64x128xf32>, vector<128x128xf32>, vector<64x128xf32> -> vector<64x128xf32>
    %c0_4 = arith.constant 0 : index
    %c0_5 = arith.constant 0 : index
    %4 = vector.load %arg3[%c0_4, %c0_5] : memref<1x128xf32, #tpu.memory_space<vmem>>, vector<1x128xf32>
    %5 = vector.broadcast %4 : vector<1x128xf32> to vector<64x128xf32>
    %6 = arith.addf %3, %5 : vector<64x128xf32>
    %7 = math.tanh %6 : vector<64x128xf32>
    %8 = vector.shape_cast %7 : vector<64x128xf32> to vector<8x8x128xf32>
    %c0_6 = arith.constant 0 : index
    %c0_7 = arith.constant 0 : index
    %9 = vector.load %arg4[%c0_6, %c0_7] : memref<1x128xf32, #tpu.memory_space<vmem>>, vector<1x128xf32>
    %10 = vector.shape_cast %9 : vector<1x128xf32> to vector<1x1x128xf32>
    %11 = vector.broadcast %10 : vector<1x1x128xf32> to vector<8x8x128xf32>
    %12 = arith.mulf %8, %11 : vector<8x8x128xf32>
    %cst_8 = arith.constant dense<0.000000e+00> : vector<8x8xf32>
    %13 = vector.multi_reduction <add>, %12, %cst_8 [2] : vector<8x8x128xf32> to vector<8x8xf32>
    %c0_9 = arith.constant 0 : index
    %c0_10 = arith.constant 0 : index
    %14 = vector.load %arg5[%c0_9, %c0_10] : memref<8x8xf32, #tpu.memory_space<vmem>>, vector<8x8xf32>
    %cst_11 = arith.constant 5.000000e-01 : f32
    %15 = vector.broadcast %cst_11 : f32 to vector<8x8xf32>
    %16 = arith.cmpf ogt, %14, %15 : vector<8x8xf32>
    %cst_12 = arith.constant 0xFF800000 : f32
    %17 = vector.broadcast %cst_12 : f32 to vector<8x8xf32>
    %18 = arith.select %16, %17, %13 : vector<8x8xi1>, vector<8x8xf32>
    %cst_13 = arith.constant dense<0xFF800000> : vector<8xf32>
    %19 = vector.multi_reduction <maximumf>, %18, %cst_13 [1] : vector<8x8xf32> to vector<8xf32>
    %20 = vector.shape_cast %19 : vector<8xf32> to vector<8x1xf32>
    %21 = vector.broadcast %20 : vector<8x1xf32> to vector<8x8xf32>
    %22 = arith.subf %18, %21 : vector<8x8xf32>
    %23 = math.exp %22 : vector<8x8xf32>
    %cst_14 = arith.constant dense<0.000000e+00> : vector<8xf32>
    %24 = vector.multi_reduction <add>, %23, %cst_14 [1] : vector<8x8xf32> to vector<8xf32>
    %25 = vector.shape_cast %24 : vector<8xf32> to vector<8x1xf32>
    %26 = vector.broadcast %25 : vector<8x1xf32> to vector<8x8xf32>
    %27 = arith.divf %23, %26 : vector<8x8xf32>
    %c0_15 = arith.constant 0 : index
    %c0_16 = arith.constant 0 : index
    %28 = vector.load %arg7[%c0_15, %c0_16] : memref<8x8xf32, #tpu.memory_space<vmem>>, vector<8x8xf32>
    tpu.vector_store %arg7[%c0_15, %c0_16], %27 {strides = array<i32>} : memref<8x8xf32, #tpu.memory_space<vmem>>, vector<8x8xf32>,
    %29 = vector.shape_cast %27 : vector<8x8xf32> to vector<8x1x8xf32>
    "tpu.trace_start"() <{level = 10 : i32, message = "bqt,btd->bqd"}> : () -> ()
    %cst_17 = arith.constant dense<0.000000e+00> : vector<8x1x128xf32>
    %30 = tpu.matmul %29, %0, %cst_17 {dimension_numbers = #tpu.dot_dimension_numbers<[2], [1], [1], [2], [0, 0, 0, 1, 1, 2], [0], [0]>} : vector<8x1x8xf32>, vector<8x8x128xf32>, vector<8x1x128xf32> -> vector<8x1x128xf32>
    "tpu.trace_stop"() : () -> ()
    %31 = vector.shape_cast %30 : vector<8x1x128xf32> to vector<8x128xf32>
    %c0_18 = arith.constant 0 : index
    %c0_19 = arith.constant 0 : index
    %32 = vector.load %arg6[%c0_18, %c0_19] : memref<8x128xf32, #tpu.memory_space<vmem>>, vector<8x128xf32>
    tpu.vector_store %arg6[%c0_18, %c0_19], %31 {strides = array<i32>} : memref<8x128xf32, #tpu.memory_space<vmem>>, vector<8x128xf32>,
    return
  }
  func.func @transform_0(%arg0: i32) -> (i32, i32, i32) {
    %c0_i32 = arith.constant 0 : i32
    %c0_i32_0 = arith.constant 0 : i32
    %c0_i32_1 = arith.constant 0 : i32
    return %arg0, %c0_i32, %c0_i32_0 : i32, i32, i32
  }
  func.func @transform_1(%arg0: i32) -> (i32, i32) {
    %c0_i32 = arith.constant 0 : i32
    %c0_i32_0 = arith.constant 0 : i32
    %c0_i32_1 = arith.constant 0 : i32
    return %c0_i32, %c0_i32_0 : i32, i32
  }
  func.func @transform_2(%arg0: i32) -> (i32, i32) {
    %c0_i32 = arith.constant 0 : i32
    %c0_i32_0 = arith.constant 0 : i32
    %c0_i32_1 = arith.constant 0 : i32
    return %c0_i32, %c0_i32_0 : i32, i32
  }
  func.func @transform_3(%arg0: i32) -> (i32, i32) {
    %c0_i32 = arith.constant 0 : i32
    %c0_i32_0 = arith.constant 0 : i32
    %c0_i32_1 = arith.constant 0 : i32
    return %c0_i32, %c0_i32_0 : i32, i32
  }
  func.func @transform_4(%arg0: i32) -> (i32, i32) {
    %c0_i32 = arith.constant 0 : i32
    %c0_i32_0 = arith.constant 0 : i32
    return %arg0, %c0_i32 : i32, i32
  }
  func.func @transform_5(%arg0: i32) -> (i32, i32) {
    %c0_i32 = arith.constant 0 : i32
    %c0_i32_0 = arith.constant 0 : i32
    return %arg0, %c0_i32 : i32, i32
  }
  func.func @transform_6(%arg0: i32) -> (i32, i32) {
    %c0_i32 = arith.constant 0 : i32
    %c0_i32_0 = arith.constant 0 : i32
    return %arg0, %c0_i32 : i32, i32
  }
}

</mosaic_0001>

<llo_original>
// kernel: tpu_custom_call.1
$region0: #{tpu_custom_call.1}
  #allocation0 [shape = 'u32[]', space=smem, size = 0x4, offset = 0x4, fixed_abs, tag = 'smem constant byte address 0x4 - core index']
  #allocation1 [shape = 'u32[144,128]{1,0:T(1,128)}', space=vmem, size = 0x12000, scoped, tag = 'internal scratch']
  %s0 = inlined_call_operand.hbm [shape: f32[8,8,128], index: 0, kind: input, shape index: {}]
  %s1 = inlined_call_operand.hbm [shape: f32[128,128], index: 1, kind: input, shape index: {}]
  %s2 = inlined_call_operand.vmem [shape: f32[1,128], index: 2, kind: input, shape index: {}]
  %s3 = inlined_call_operand.vmem [shape: f32[1,128], index: 3, kind: input, shape index: {}]
  %s4 = inlined_call_operand.vmem [shape: f32[8,8], index: 4, kind: input, shape index: {}]
  %s5 = inlined_call_operand.hbm [shape: f32[8,128], index: 5, kind: output, shape index: {0}]
  %s6 = inlined_call_operand.hbm [shape: f32[8,8], index: 6, kind: output, shape index: {1}]
  %7 = xla_tuple %s5, %s6
  %s8 = sld [smem:[#allocation0]]
  $region46: #{tpu_custom_call.1} parent=0
    _
  %s10 = ssub.s32 1, %s8
  %s11 = scalar_select 0, %s10, %s8
  $region1: #{tpu_custom_call.1} parent=0
    #allocation2 [shape = 'u8[32768]{0}', space=vmem, size = 0x8000, scoped, tag = 'input window, operand 0, single buffered']
    #allocation3 [shape = 's32[1]{0}', space=sflag, size = 0x4, scoped, tag = 'scoped memory for tpu_custom_call.1']
    #allocation4 [shape = 's32[1]{0}', space=sflag, size = 0x4, scoped, tag = 'scoped memory for tpu_custom_call.1']
    #allocation5 [shape = 'u8[65536]{0}', space=vmem, size = 0x10000, scoped, tag = 'input window, operand 1, single buffered']
    #allocation6 [shape = 's32[1]{0}', space=sflag, size = 0x4, scoped, tag = 'scoped memory for tpu_custom_call.1']
    #allocation7 [shape = 'u8[4096]{0}', space=vmem, size = 0x1000, scoped, tag = 'output window, operand 0, single buffered']
    #allocation8 [shape = 'u8[4096]{0}', space=vmem, size = 0x1000, scoped, tag = 'output window, operand 1, single buffered']
    #allocation9 [shape = 's32[1]{0}', space=sflag, size = 0x4, scoped, tag = 'scoped memory for tpu_custom_call.1']
    %12 = vsyncpa [#allocation3], 0
    %13 = vsyncpa [#allocation6], 0
    %14 = vsyncpa [#allocation4], 0
    %15 = vsyncpa [#allocation9], 0
    // Predicated region
    $region2: #{tpu_custom_call.1} parent=1 // pred_check
      _
    $region3: #{tpu_custom_call.1} parent=1 // pred_check_branch
      %17 = sbr.rel (0) target = $region5
    $region4: #{tpu_custom_call.1} parent=1 // pred_region
      %s19 = ssub.s32 1024, 1024
      %20 = vsyncadd [#allocation3], %s19
      %s21 = sshll.u32 [#allocation2], 4
      %s22 = int_to_ptr.vmem [resolvable:$true] %s21
      %27 = dma.hbm_to_vmem [thread:$0]  %s0, 1024, %s22, [#allocation3], 128, 128, 8
    $region5: #{tpu_custom_call.1} parent=1 // pred_fallthru
      _
    // Predicated region
    $region6: #{tpu_custom_call.1} parent=1 // pred_check
      _
    $region7: #{tpu_custom_call.1} parent=1 // pred_check_branch
      %29 = sbr.rel (0) target = $region9
    $region8: #{tpu_custom_call.1} parent=1 // pred_region
      %s31 = ssub.s32 2048, 2048
      %32 = vsyncadd [#allocation6], %s31
      %s33 = sshll.u32 [#allocation5], 4
      %s34 = int_to_ptr.vmem [resolvable:$true] %s33
      %39 = dma.hbm_to_vmem [thread:$0]  %s1, 2048, %s34, [#allocation6], 128, 128, 8
    $region9: #{tpu_custom_call.1} parent=1 // pred_fallthru
      _
    // Predicated region
    $region10: #{tpu_custom_call.1} parent=1 // pred_check
      _
    $region11: #{tpu_custom_call.1} parent=1 // pred_check_branch
      %41 = sbr.rel (0) target = $region13
    $region12: #{tpu_custom_call.1} parent=1 // pred_region
      _
    $region13: #{tpu_custom_call.1} parent=1 // pred_fallthru
      _
    // Predicated region
    $region14: #{tpu_custom_call.1} parent=1 // pred_check
      _
    $region15: #{tpu_custom_call.1} parent=1 // pred_check_branch
      %43 = sbr.rel (0) target = $region17
    $region16: #{tpu_custom_call.1} parent=1 // pred_region
      _
    $region17: #{tpu_custom_call.1} parent=1 // pred_fallthru
      _
    // Predicated region
    $region18: #{tpu_custom_call.1} parent=1 // pred_check
      _
    $region19: #{tpu_custom_call.1} parent=1 // pred_check_branch
      %45 = sbr.rel (0) target = $region21
    $region20: #{tpu_custom_call.1} parent=1 // pred_region
      _
    $region21: #{tpu_custom_call.1} parent=1 // pred_fallthru
      _
    // Predicated region
    $region22: #{tpu_custom_call.1} parent=1 // pred_check
      _
    $region23: #{tpu_custom_call.1} parent=1 // pred_check_branch
      %47 = sbr.rel (0) target = $region25
    $region24: #{tpu_custom_call.1} parent=1 // pred_region
      %48 = dma.done [#allocation3], 1024
    $region25: #{tpu_custom_call.1} parent=1 // pred_fallthru
      _
    // Predicated region
    $region26: #{tpu_custom_call.1} parent=1 // pred_check
      _
    $region27: #{tpu_custom_call.1} parent=1 // pred_check_branch
      %50 = sbr.rel (0) target = $region29
    $region28: #{tpu_custom_call.1} parent=1 // pred_region
      %51 = dma.done [#allocation6], 2048
    $region29: #{tpu_custom_call.1} parent=1 // pred_fallthru
      _
    %v52 = vld [vmem:[#allocation2] sm:$0xff]
    %v53 = vld [vmem:[#allocation2 + $0x8] sm:$0xff]
    %v54 = vld [vmem:[#allocation2 + $0x10] sm:$0xff]
    %v55 = vld [vmem:[#allocation2 + $0x18] sm:$0xff]
    %v56 = vld [vmem:[#allocation2 + $0x20] sm:$0xff]
    %v57 = vld [vmem:[#allocation2 + $0x28] sm:$0xff]
    %v58 = vld [vmem:[#allocation2 + $0x30] sm:$0xff]
    %v59 = vld [vmem:[#allocation2 + $0x38] sm:$0xff]
    %v60 = vld [vmem:[#allocation5] sm:$0xff]
    %v61 = vld [vmem:[#allocation5 + $0x8] sm:$0xff]
    %v62 = vld [vmem:[#allocation5 + $0x10] sm:$0xff]
    %v63 = vld [vmem:[#allocation5 + $0x18] sm:$0xff]
    %v64 = vld [vmem:[#allocation5 + $0x20] sm:$0xff]
    %v65 = vld [vmem:[#allocation5 + $0x28] sm:$0xff]
    %v66 = vld [vmem:[#allocation5 + $0x30] sm:$0xff]
    %v67 = vld [vmem:[#allocation5 + $0x38] sm:$0xff]
    %v68 = vld [vmem:[#allocation5 + $0x40] sm:$0xff]
    %v69 = vld [vmem:[#allocation5 + $0x48] sm:$0xff]
    %v70 = vld [vmem:[#allocation5 + $0x50] sm:$0xff]
    %v71 = vld [vmem:[#allocation5 + $0x58] sm:$0xff]
    %v72 = vld [vmem:[#allocation5 + $0x60] sm:$0xff]
    %v73 = vld [vmem:[#allocation5 + $0x68] sm:$0xff]
    %v74 = vld [vmem:[#allocation5 + $0x70] sm:$0xff]
    %v75 = vld [vmem:[#allocation5 + $0x78] sm:$0xff]
    %v76 = vld [vmem:[%s2] sm:$0x1]
    %v78 = vlaneseq
    %v79 = vshrl.u32 %v78, 7
    %v80 = vsub.s32 0, %v79
    %v81 = vrot.slane %v76, %v80
    %83 = vmatprep.subr.mxu0 0.0
    %84 = vmatpush1.msra.mxu0 %v60
    %85 = vmatprep.subr.mxu0 0.0
    %86 = vmatpush1.msra.mxu0 %v61
    %87 = vmatprep.subr.mxu0 0.0
    %88 = vmatpush1.msra.mxu0 %v62
    %89 = vmatprep.subr.mxu0 0.0
    %90 = vmatpush1.msra.mxu0 %v63
    %91 = vmatprep.subr.mxu0 0.0
    %92 = vmatpush1.msra.mxu0 %v64
    %93 = vmatprep.subr.mxu0 0.0
    %94 = vmatpush1.msra.mxu0 %v65
    %95 = vmatprep.subr.mxu0 0.0
    %96 = vmatpush1.msra.mxu0 %v66
    %97 = vmatprep.subr.mxu0 0.0
    %98 = vmatpush1.msra.mxu0 %v67
    %99 = vmatprep.subr.mxu0 0.0
    %100 = vmatpush1.msra.mxu0 %v68
    %101 = vmatprep.subr.mxu0 0.0
    %102 = vmatpush1.msra.mxu0 %v69
    %103 = vmatprep.subr.mxu0 0.0
    %104 = vmatpush1.msra.mxu0 %v70
    %105 = vmatprep.subr.mxu0 0.0
    %106 = vmatpush1.msra.mxu0 %v71
    %107 = vmatprep.subr.mxu0 0.0
    %108 = vmatpush1.msra.mxu0 %v72
    %109 = vmatprep.subr.mxu0 0.0
    %110 = vmatpush1.msra.mxu0 %v73
    %111 = vmatprep.subr.mxu0 0.0
    %112 = vmatpush1.msra.mxu0 %v74
    %113 = vmatprep.subr.mxu0 0.0
    %114 = vmatpush1.msra.mxu0 %v75
    %115 = vmatprep.subr.mxu0 0.0
    %116 = vmatpush1.msra.mxu0 0.0
    %117 = vmatprep.subr.mxu0 0.0
    %118 = vmatpush1.msra.mxu0 0.0
    %119 = vmatprep.subr.mxu0 0.0
    %120 = vmatpush1.msra.mxu0 0.0
    %121 = vmatprep.subr.mxu0 0.0
    %122 = vmatpush1.msra.mxu0 0.0
    %123 = vmatprep.subr.mxu0 0.0
    %124 = vmatpush1.msra.mxu0 0.0
    %125 = vmatprep.subr.mxu0 0.0
    %126 = vmatpush1.msra.mxu0 0.0
    %127 = vmatprep.subr.mxu0 0.0
    %128 = vmatpush1.msra.mxu0 0.0
    %129 = vmatprep.subr.mxu0 0.0
    %130 = vmatpush1.msra.mxu0 0.0
    %131 = vmatprep.subr.mxu0 0.0
    %132 = vmatpush1.msra.mxu0 0.0
    %133 = vmatprep.subr.mxu0 0.0
    %134 = vmatpush1.msra.mxu0 0.0
    %135 = vmatprep.subr.mxu0 0.0
    %136 = vmatpush1.msra.mxu0 0.0
    %137 = vmatprep.subr.mxu0 0.0
    %138 = vmatpush1.msra.mxu0 0.0
    %139 = vmatprep.subr.mxu0 0.0
    %140 = vmatpush1.msra.mxu0 0.0
    %141 = vmatprep.subr.mxu0 0.0
    %142 = vmatpush1.msra.mxu0 0.0
    %143 = vmatprep.subr.mxu0 0.0
    %144 = vmatpush1.msra.mxu0 0.0
    %145 = vmatprep.subr.mxu0 0.0
    %146 = vmatpush1.msra.mxu0 0.0
    %147 = vmatprep.mubr.f32.mxu0 0.0
    %148 = vmatmul.mubr.f32.gmra.mrb[0].mxu0 %v52
    %v149 = vpop.f32.mrb[0].mxu0
    %v150 = vadd.f32 %v81, %v149
    %v151 = vpop.f32.mrb[0].mxu0
    %152 = vmatprep.mubr.f32.mxu0 0.0
    %153 = vmatmul.mubr.f32.gmra.mrb[0].mxu0 %v53
    %v154 = vpop.f32.mrb[0].mxu0
    %v155 = vadd.f32 %v81, %v154
    %v156 = vpop.f32.mrb[0].mxu0
    %157 = vmatprep.mubr.f32.mxu0 0.0
    %158 = vmatmul.mubr.f32.gmra.mrb[0].mxu0 %v54
    %v159 = vpop.f32.mrb[0].mxu0
    %v160 = vadd.f32 %v81, %v159
    %v161 = vpop.f32.mrb[0].mxu0
    %162 = vmatprep.mubr.f32.mxu0 0.0
    %163 = vmatmul.mubr.f32.gmra.mrb[0].mxu0 %v55
    %v164 = vpop.f32.mrb[0].mxu0
    %v165 = vadd.f32 %v81, %v164
    %v166 = vpop.f32.mrb[0].mxu0
    %167 = vmatprep.mubr.f32.mxu0 0.0
    %168 = vmatmul.mubr.f32.gmra.mrb[0].mxu0 %v56
    %v169 = vpop.f32.mrb[0].mxu0
    %v170 = vadd.f32 %v81, %v169
    %v171 = vpop.f32.mrb[0].mxu0
    %172 = vmatprep.mubr.f32.mxu0 0.0
    %173 = vmatmul.mubr.f32.gmra.mrb[0].mxu0 %v57
    %v174 = vpop.f32.mrb[0].mxu0
    %v175 = vadd.f32 %v81, %v174
    %v176 = vpop.f32.mrb[0].mxu0
    %177 = vmatprep.mubr.f32.mxu0 0.0
    %178 = vmatmul.mubr.f32.gmra.mrb[0].mxu0 %v58
    %v179 = vpop.f32.mrb[0].mxu0
    %v180 = vadd.f32 %v81, %v179
    %v181 = vpop.f32.mrb[0].mxu0
    %182 = vmatprep.mubr.f32.mxu0 0.0
    %183 = vmatmul.mubr.f32.gmra.mrb[0].mxu0 %v59
    %v184 = vpop.f32.mrb[0].mxu0
    %v185 = vadd.f32 %v81, %v184
    %v186 = vpop.f32.mrb[0].mxu0
    %187 = vdwg.mxu0
    %v188 = vtanh.pop %v150
    %v189 = vtanh.pop %v155
    %v190 = vtanh.pop %v160
    %v191 = vtanh.pop %v165
    %v192 = vtanh.pop %v170
    %v193 = vtanh.pop %v175
    %v194 = vtanh.pop %v180
    %v195 = vtanh.pop %v185
    %v196 = vld [vmem:[%s3] sm:$0x1]
    %v198 = vlaneseq
    %v199 = vshrl.u32 %v198, 7
    %v200 = vsub.s32 0, %v199
    %v201 = vrot.slane %v196, %v200
    %v203 = vmul.f32 %v188, %v201
    %v204 = vmul.f32 %v189, %v201
    %v205 = vmul.f32 %v190, %v201
    %v206 = vmul.f32 %v191, %v201
    %v207 = vmul.f32 %v192, %v201
    %v208 = vmul.f32 %v193, %v201
    %v209 = vmul.f32 %v194, %v201
    %v210 = vmul.f32 %v195, %v201
    %211 = vadd.xlane.f32.xlu0 %v203
    %v212 = vpop.xlane.xlu0 %211
    %213 = vadd.xlane.f32.xlu0 %v204
    %v214 = vpop.xlane.xlu0 %213
    %215 = vadd.xlane.f32.xlu0 %v205
    %v216 = vpop.xlane.xlu0 %215
    %217 = vadd.xlane.f32.xlu0 %v206
    %v218 = vpop.xlane.xlu0 %217
    %219 = vadd.xlane.f32.xlu0 %v207
    %v220 = vpop.xlane.xlu0 %219
    %221 = vadd.xlane.f32.xlu0 %v208
    %v222 = vpop.xlane.xlu0 %221
    %223 = vadd.xlane.f32.xlu0 %v209
    %v224 = vpop.xlane.xlu0 %223
    %225 = vadd.xlane.f32.xlu0 %v210
    %v226 = vpop.xlane.xlu0 %225
    %v227 = vld [vmem:[%s4] sm:$0xff]
    %vm228 = vcmp.gt.f32.partialorder %v227, 0.5
    %v237 = vlaneseq
    %v238 = vand.u32 %v237, 127
    %v239 = vlaneseq
    %v240 = vshrl.u32 %v239, 7
    %v241 = vsub.s32 %v238, %v240
    %v242 = vrot.slane %v212, %v241
    %v243 = vlaneseq
    %v244 = vshrl.u32 %v243, 7
    %v245 = vsub.s32 %v238, %v244
    %v246 = vrot.slane %v214, %v245
    %v247 = vlaneseq
    %v248 = vshrl.u32 %v247, 7
    %v249 = vsub.s32 %v238, %v248
    %v250 = vrot.slane %v216, %v249
    %v251 = vlaneseq
    %v252 = vshrl.u32 %v251, 7
    %v253 = vsub.s32 %v238, %v252
    %v254 = vrot.slane %v218, %v253
    %v255 = vlaneseq
    %v256 = vshrl.u32 %v255, 7
    %v257 = vsub.s32 %v238, %v256
    %v258 = vrot.slane %v220, %v257
    %v259 = vlaneseq
    %v260 = vshrl.u32 %v259, 7
    %v261 = vsub.s32 %v238, %v260
    %v262 = vrot.slane %v222, %v261
    %v263 = vlaneseq
    %v264 = vshrl.u32 %v263, 7
    %v265 = vsub.s32 %v238, %v264
    %v266 = vrot.slane %v224, %v265
    %v267 = vlaneseq
    %v268 = vshrl.u32 %v267, 7
    %v269 = vsub.s32 %v238, %v268
    %v270 = vrot.slane %v226, %v269
    %vm271 = vcmask 1041409
    %v272 = vsel %vm271, %v246, %v242
    %vm273 = vcmask 1042434
    %v274 = vsel %vm273, %v250, %v272
    %vm275 = vcmask 1043459
    %v276 = vsel %vm275, %v254, %v274
    %vm277 = vcmask 1044484
    %v278 = vsel %vm277, %v258, %v276
    %vm279 = vcmask 1045509
    %v280 = vsel %vm279, %v262, %v278
    %vm281 = vcmask 1046534
    %v282 = vsel %vm281, %v266, %v280
    %vm283 = vcmask 1047559
    %v284 = vsel %vm283, %v270, %v282
    %v286 = vsel %vm228, -inf, %v284
    %vm287 = vcmask 64512
    %v288 = vsel %vm287, %v286, -inf
    %289 = vmax.xlane.f32.xlu0 %v288
    %v290 = vpop.xlane.xlu0 %289
    %v291 = vsub.f32 %v286, %v290
    %v292 = vmul.f32 %v291, 1.442695
    %v293 = vpow.pop %v292
    %v294 = vsel %vm287, %v293, 0.0
    %295 = vadd.xlane.f32.xlu0 %v294
    %v296 = vpop.xlane.xlu0 %295
    %v297 = vrcp.pop %v296
    %v298 = vmul.f32 %v293, %v297
    %299 = vst.msk [vmem:[#allocation8] sm:$0xff] %vm287, %v298
    %v301 = vcombine.high %v298, %v298
    %v303 = vunpack.c.l.s4 1966171168
    %v304 = vunpack.c.0.s8 %v303
    %v305 = vlaneseq
    %v306 = vshrl.u32 %v305, 7
    %v307 = vsub.s32 %v304, %v306
    %v308 = vrot.slane %v298, %v307
    %v310 = vunpack.c.l.s4 1966171168
    %v311 = vunpack.c.0.s8 %v310
    %v312 = vlaneseq
    %v313 = vshrl.u32 %v312, 7
    %v314 = vsub.s32 %v311, %v313
    %v315 = vrot.slane %v301, %v314
    %v316 = vcombine.high %v308, %v308
    %v317 = vcombine.high %v315, %v315
    %v319 = vunpack.c.l.s4 1966171168
    %v320 = vunpack.c.0.s8 %v319
    %v321 = vlaneseq
    %v322 = vshrl.u32 %v321, 7
    %v323 = vsub.s32 %v320, %v322
    %v324 = vrot.slane %v308, %v323
    %v326 = vunpack.c.l.s4 1966171168
    %v327 = vunpack.c.0.s8 %v326
    %v328 = vlaneseq
    %v329 = vshrl.u32 %v328, 7
    %v330 = vsub.s32 %v327, %v329
    %v331 = vrot.slane %v315, %v330
    %v333 = vunpack.c.l.s4 1966171168
    %v334 = vunpack.c.0.s8 %v333
    %v335 = vlaneseq
    %v336 = vshrl.u32 %v335, 7
    %v337 = vsub.s32 %v334, %v336
    %v338 = vrot.slane %v316, %v337
    %v340 = vunpack.c.l.s4 1966171168
    %v341 = vunpack.c.0.s8 %v340
    %v342 = vlaneseq
    %v343 = vshrl.u32 %v342, 7
    %v344 = vsub.s32 %v341, %v343
    %v345 = vrot.slane %v317, %v344
    %v346 = vcombine.high %v324, %v324
    %v347 = vcombine.high %v331, %v331
    %v348 = vcombine.high %v338, %v338
    %v349 = vcombine.high %v345, %v345
    %v350 = vsel %vm287, %v324, 0
    %352 = vmatprep.subr.mxu0 0.0
    %353 = vmatpush1.msra.mxu0 %v52
    %354 = vmatprep.subr.mxu0 0.0
    %355 = vmatpush1.msra.mxu0 0.0
    %356 = vmatprep.subr.mxu0 0.0
    %357 = vmatpush1.msra.mxu0 0.0
    %358 = vmatprep.subr.mxu0 0.0
    %359 = vmatpush1.msra.mxu0 0.0
    %360 = vmatprep.subr.mxu0 0.0
    %361 = vmatpush1.msra.mxu0 0.0
    %362 = vmatprep.subr.mxu0 0.0
    %363 = vmatpush1.msra.mxu0 0.0
    %364 = vmatprep.subr.mxu0 0.0
    %365 = vmatpush1.msra.mxu0 0.0
    %366 = vmatprep.subr.mxu0 0.0
    %367 = vmatpush1.msra.mxu0 0.0
    %368 = vmatprep.subr.mxu0 0.0
    %369 = vmatpush1.msra.mxu0 0.0
    %370 = vmatprep.subr.mxu0 0.0
    %371 = vmatpush1.msra.mxu0 0.0
    %372 = vmatprep.subr.mxu0 0.0
    %373 = vmatpush1.msra.mxu0 0.0
    %374 = vmatprep.subr.mxu0 0.0
    %375 = vmatpush1.msra.mxu0 0.0
    %376 = vmatprep.subr.mxu0 0.0
    %377 = vmatpush1.msra.mxu0 0.0
    %378 = vmatprep.subr.mxu0 0.0
    %379 = vmatpush1.msra.mxu0 0.0
    %380 = vmatprep.subr.mxu0 0.0
    %381 = vmatpush1.msra.mxu0 0.0
    %382 = vmatprep.subr.mxu0 0.0
    %383 = vmatpush1.msra.mxu0 0.0
    %384 = vmatprep.subr.mxu0 0.0
    %385 = vmatpush1.msra.mxu0 0.0
    %386 = vmatprep.subr.mxu0 0.0
    %387 = vmatpush1.msra.mxu0 0.0
    %388 = vmatprep.subr.mxu0 0.0
    %389 = vmatpush1.msra.mxu0 0.0
    %390 = vmatprep.subr.mxu0 0.0
    %391 = vmatpush1.msra.mxu0 0.0
    %392 = vmatprep.subr.mxu0 0.0
    %393 = vmatpush1.msra.mxu0 0.0
    %394 = vmatprep.subr.mxu0 0.0
    %395 = vmatpush1.msra.mxu0 0.0
    %396 = vmatprep.subr.mxu0 0.0
    %397 = vmatpush1.msra.mxu0 0.0
    %398 = vmatprep.subr.mxu0 0.0
    %399 = vmatpush1.msra.mxu0 0.0
    %400 = vmatprep.subr.mxu0 0.0
    %401 = vmatpush1.msra.mxu0 0.0
    %402 = vmatprep.subr.mxu0 0.0
    %403 = vmatpush1.msra.mxu0 0.0
    %404 = vmatprep.subr.mxu0 0.0
    %405 = vmatpush1.msra.mxu0 0.0
    %406 = vmatprep.subr.mxu0 0.0
    %407 = vmatpush1.msra.mxu0 0.0
    %408 = vmatprep.subr.mxu0 0.0
    %409 = vmatpush1.msra.mxu0 0.0
    %410 = vmatprep.subr.mxu0 0.0
    %411 = vmatpush1.msra.mxu0 0.0
    %412 = vmatprep.subr.mxu0 0.0
    %413 = vmatpush1.msra.mxu0 0.0
    %414 = vmatprep.subr.mxu0 0.0
    %415 = vmatpush1.msra.mxu0 0.0
    %416 = vmatprep.mubr.f32.mxu0 0.0
    %417 = vmatmul.mubr.f32.gmra.mrb[0].mxu0 %v350
    %v418 = vpop.f32.mrb[0].mxu0
    %v419 = vadd.f32 0.0, %v418
    %v420 = vpop.f32.mrb[0].mxu0
    %421 = vdwg.mxu0
    %v422 = vsel %vm287, %v338, 0
    %424 = vmatprep.subr.mxu0 0.0
    %425 = vmatpush1.msra.mxu0 %v53
    %426 = vmatprep.subr.mxu0 0.0
    %427 = vmatpush1.msra.mxu0 0.0
    %428 = vmatprep.subr.mxu0 0.0
    %429 = vmatpush1.msra.mxu0 0.0
    %430 = vmatprep.subr.mxu0 0.0
    %431 = vmatpush1.msra.mxu0 0.0
    %432 = vmatprep.subr.mxu0 0.0
    %433 = vmatpush1.msra.mxu0 0.0
    %434 = vmatprep.subr.mxu0 0.0
    %435 = vmatpush1.msra.mxu0 0.0
    %436 = vmatprep.subr.mxu0 0.0
    %437 = vmatpush1.msra.mxu0 0.0
    %438 = vmatprep.subr.mxu0 0.0
    %439 = vmatpush1.msra.mxu0 0.0
    %440 = vmatprep.subr.mxu0 0.0
    %441 = vmatpush1.msra.mxu0 0.0
    %442 = vmatprep.subr.mxu0 0.0
    %443 = vmatpush1.msra.mxu0 0.0
    %444 = vmatprep.subr.mxu0 0.0
    %445 = vmatpush1.msra.mxu0 0.0
    %446 = vmatprep.subr.mxu0 0.0
    %447 = vmatpush1.msra.mxu0 0.0
    %448 = vmatprep.subr.mxu0 0.0
    %449 = vmatpush1.msra.mxu0 0.0
    %450 = vmatprep.subr.mxu0 0.0
    %451 = vmatpush1.msra.mxu0 0.0
    %452 = vmatprep.subr.mxu0 0.0
    %453 = vmatpush1.msra.mxu0 0.0
    %454 = vmatprep.subr.mxu0 0.0
    %455 = vmatpush1.msra.mxu0 0.0
    %456 = vmatprep.subr.mxu0 0.0
    %457 = vmatpush1.msra.mxu0 0.0
    %458 = vmatprep.subr.mxu0 0.0
    %459 = vmatpush1.msra.mxu0 0.0
    %460 = vmatprep.subr.mxu0 0.0
    %461 = vmatpush1.msra.mxu0 0.0
    %462 = vmatprep.subr.mxu0 0.0
    %463 = vmatpush1.msra.mxu0 0.0
    %464 = vmatprep.subr.mxu0 0.0
    %465 = vmatpush1.msra.mxu0 0.0
    %466 = vmatprep.subr.mxu0 0.0
    %467 = vmatpush1.msra.mxu0 0.0
    %468 = vmatprep.subr.mxu0 0.0
    %469 = vmatpush1.msra.mxu0 0.0
    %470 = vmatprep.subr.mxu0 0.0
    %471 = vmatpush1.msra.mxu0 0.0
    %472 = vmatprep.subr.mxu0 0.0
    %473 = vmatpush1.msra.mxu0 0.0
    %474 = vmatprep.subr.mxu0 0.0
    %475 = vmatpush1.msra.mxu0 0.0
    %476 = vmatprep.subr.mxu0 0.0
    %477 = vmatpush1.msra.mxu0 0.0
    %478 = vmatprep.subr.mxu0 0.0
    %479 = vmatpush1.msra.mxu0 0.0
    %480 = vmatprep.subr.mxu0 0.0
    %481 = vmatpush1.msra.mxu0 0.0
    %482 = vmatprep.subr.mxu0 0.0
    %483 = vmatpush1.msra.mxu0 0.0
    %484 = vmatprep.subr.mxu0 0.0
    %485 = vmatpush1.msra.mxu0 0.0
    %486 = vmatprep.subr.mxu0 0.0
    %487 = vmatpush1.msra.mxu0 0.0
    %488 = vmatprep.mubr.f32.mxu0 0.0
    %489 = vmatmul.mubr.f32.gmra.mrb[0].mxu0 %v422
    %v490 = vpop.f32.mrb[0].mxu0
    %v491 = vadd.f32 0.0, %v490
    %v492 = vpop.f32.mrb[0].mxu0
    %493 = vdwg.mxu0
    %v494 = vsel %vm287, %v346, 0
    %496 = vmatprep.subr.mxu0 0.0
    %497 = vmatpush1.msra.mxu0 %v54
    %498 = vmatprep.subr.mxu0 0.0
    %499 = vmatpush1.msra.mxu0 0.0
    %500 = vmatprep.subr.mxu0 0.0
    %501 = vmatpush1.msra.mxu0 0.0
    %502 = vmatprep.subr.mxu0 0.0
    %503 = vmatpush1.msra.mxu0 0.0
    %504 = vmatprep.subr.mxu0 0.0
    %505 = vmatpush1.msra.mxu0 0.0
    %506 = vmatprep.subr.mxu0 0.0
    %507 = vmatpush1.msra.mxu0 0.0
    %508 = vmatprep.subr.mxu0 0.0
    %509 = vmatpush1.msra.mxu0 0.0
    %510 = vmatprep.subr.mxu0 0.0
    %511 = vmatpush1.msra.mxu0 0.0
    %512 = vmatprep.subr.mxu0 0.0
    %513 = vmatpush1.msra.mxu0 0.0
    %514 = vmatprep.subr.mxu0 0.0
    %515 = vmatpush1.msra.mxu0 0.0
    %516 = vmatprep.subr.mxu0 0.0
    %517 = vmatpush1.msra.mxu0 0.0
    %518 = vmatprep.subr.mxu0 0.0
    %519 = vmatpush1.msra.mxu0 0.0
    %520 = vmatprep.subr.mxu0 0.0
    %521 = vmatpush1.msra.mxu0 0.0
    %522 = vmatprep.subr.mxu0 0.0
    %523 = vmatpush1.msra.mxu0 0.0
    %524 = vmatprep.subr.mxu0 0.0
    %525 = vmatpush1.msra.mxu0 0.0
    %526 = vmatprep.subr.mxu0 0.0
    %527 = vmatpush1.msra.mxu0 0.0
    %528 = vmatprep.subr.mxu0 0.0
    %529 = vmatpush1.msra.mxu0 0.0
    %530 = vmatprep.subr.mxu0 0.0
    %531 = vmatpush1.msra.mxu0 0.0
    %532 = vmatprep.subr.mxu0 0.0
    %533 = vmatpush1.msra.mxu0 0.0
    %534 = vmatprep.subr.mxu0 0.0
    %535 = vmatpush1.msra.mxu0 0.0
    %536 = vmatprep.subr.mxu0 0.0
    %537 = vmatpush1.msra.mxu0 0.0
    %538 = vmatprep.subr.mxu0 0.0
    %539 = vmatpush1.msra.mxu0 0.0
    %540 = vmatprep.subr.mxu0 0.0
    %541 = vmatpush1.msra.mxu0 0.0
    %542 = vmatprep.subr.mxu0 0.0
    %543 = vmatpush1.msra.mxu0 0.0
    %544 = vmatprep.subr.mxu0 0.0
    %545 = vmatpush1.msra.mxu0 0.0
    %546 = vmatprep.subr.mxu0 0.0
    %547 = vmatpush1.msra.mxu0 0.0
    %548 = vmatprep.subr.mxu0 0.0
    %549 = vmatpush1.msra.mxu0 0.0
    %550 = vmatprep.subr.mxu0 0.0
    %551 = vmatpush1.msra.mxu0 0.0
    %552 = vmatprep.subr.mxu0 0.0
    %553 = vmatpush1.msra.mxu0 0.0
    %554 = vmatprep.subr.mxu0 0.0
    %555 = vmatpush1.msra.mxu0 0.0
    %556 = vmatprep.subr.mxu0 0.0
    %557 = vmatpush1.msra.mxu0 0.0
    %558 = vmatprep.subr.mxu0 0.0
    %559 = vmatpush1.msra.mxu0 0.0
    %560 = vmatprep.mubr.f32.mxu0 0.0
    %561 = vmatmul.mubr.f32.gmra.mrb[0].mxu0 %v494
    %v562 = vpop.f32.mrb[0].mxu0
    %v563 = vadd.f32 0.0, %v562
    %v564 = vpop.f32.mrb[0].mxu0
    %565 = vdwg.mxu0
    %v566 = vsel %vm287, %v348, 0
    %568 = vmatprep.subr.mxu0 0.0
    %569 = vmatpush1.msra.mxu0 %v55
    %570 = vmatprep.subr.mxu0 0.0
    %571 = vmatpush1.msra.mxu0 0.0
    %572 = vmatprep.subr.mxu0 0.0
    %573 = vmatpush1.msra.mxu0 0.0
    %574 = vmatprep.subr.mxu0 0.0
    %575 = vmatpush1.msra.mxu0 0.0
    %576 = vmatprep.subr.mxu0 0.0
    %577 = vmatpush1.msra.mxu0 0.0
    %578 = vmatprep.subr.mxu0 0.0
    %579 = vmatpush1.msra.mxu0 0.0
    %580 = vmatprep.subr.mxu0 0.0
    %581 = vmatpush1.msra.mxu0 0.0
    %582 = vmatprep.subr.mxu0 0.0
    %583 = vmatpush1.msra.mxu0 0.0
    %584 = vmatprep.subr.mxu0 0.0
    %585 = vmatpush1.msra.mxu0 0.0
    %586 = vmatprep.subr.mxu0 0.0
    %587 = vmatpush1.msra.mxu0 0.0
    %588 = vmatprep.subr.mxu0 0.0
    %589 = vmatpush1.msra.mxu0 0.0
    %590 = vmatprep.subr.mxu0 0.0
    %591 = vmatpush1.msra.mxu0 0.0
    %592 = vmatprep.subr.mxu0 0.0
    %593 = vmatpush1.msra.mxu0 0.0
    %594 = vmatprep.subr.mxu0 0.0
    %595 = vmatpush1.msra.mxu0 0.0
    %596 = vmatprep.subr.mxu0 0.0
    %597 = vmatpush1.msra.mxu0 0.0
    %598 = vmatprep.subr.mxu0 0.0
    %599 = vmatpush1.msra.mxu0 0.0
    %600 = vmatprep.subr.mxu0 0.0
    %601 = vmatpush1.msra.mxu0 0.0
    %602 = vmatprep.subr.mxu0 0.0
    %603 = vmatpush1.msra.mxu0 0.0
    %604 = vmatprep.subr.mxu0 0.0
    %605 = vmatpush1.msra.mxu0 0.0
    %606 = vmatprep.subr.mxu0 0.0
    %607 = vmatpush1.msra.mxu0 0.0
    %608 = vmatprep.subr.mxu0 0.0
    %609 = vmatpush1.msra.mxu0 0.0
    %610 = vmatprep.subr.mxu0 0.0
    %611 = vmatpush1.msra.mxu0 0.0
    %612 = vmatprep.subr.mxu0 0.0
    %613 = vmatpush1.msra.mxu0 0.0
    %614 = vmatprep.subr.mxu0 0.0
    %615 = vmatpush1.msra.mxu0 0.0
    %616 = vmatprep.subr.mxu0 0.0
    %617 = vmatpush1.msra.mxu0 0.0
    %618 = vmatprep.subr.mxu0 0.0
    %619 = vmatpush1.msra.mxu0 0.0
    %620 = vmatprep.subr.mxu0 0.0
    %621 = vmatpush1.msra.mxu0 0.0
    %622 = vmatprep.subr.mxu0 0.0
    %623 = vmatpush1.msra.mxu0 0.0
    %624 = vmatprep.subr.mxu0 0.0
    %625 = vmatpush1.msra.mxu0 0.0
    %626 = vmatprep.subr.mxu0 0.0
    %627 = vmatpush1.msra.mxu0 0.0
    %628 = vmatprep.subr.mxu0 0.0
    %629 = vmatpush1.msra.mxu0 0.0
    %630 = vmatprep.subr.mxu0 0.0
    %631 = vmatpush1.msra.mxu0 0.0
    %632 = vmatprep.mubr.f32.mxu0 0.0
    %633 = vmatmul.mubr.f32.gmra.mrb[0].mxu0 %v566
    %v634 = vpop.f32.mrb[0].mxu0
    %v635 = vadd.f32 0.0, %v634
    %v636 = vpop.f32.mrb[0].mxu0
    %637 = vdwg.mxu0
    %v638 = vsel %vm287, %v331, 0
    %640 = vmatprep.subr.mxu0 0.0
    %641 = vmatpush1.msra.mxu0 %v56
    %642 = vmatprep.subr.mxu0 0.0
    %643 = vmatpush1.msra.mxu0 0.0
    %644 = vmatprep.subr.mxu0 0.0
    %645 = vmatpush1.msra.mxu0 0.0
    %646 = vmatprep.subr.mxu0 0.0
    %647 = vmatpush1.msra.mxu0 0.0
    %648 = vmatprep.subr.mxu0 0.0
    %649 = vmatpush1.msra.mxu0 0.0
    %650 = vmatprep.subr.mxu0 0.0
    %651 = vmatpush1.msra.mxu0 0.0
    %652 = vmatprep.subr.mxu0 0.0
    %653 = vmatpush1.msra.mxu0 0.0
    %654 = vmatprep.subr.mxu0 0.0
    %655 = vmatpush1.msra.mxu0 0.0
    %656 = vmatprep.subr.mxu0 0.0
    %657 = vmatpush1.msra.mxu0 0.0
    %658 = vmatprep.subr.mxu0 0.0
    %659 = vmatpush1.msra.mxu0 0.0
    %660 = vmatprep.subr.mxu0 0.0
    %661 = vmatpush1.msra.mxu0 0.0
    %662 = vmatprep.subr.mxu0 0.0
    %663 = vmatpush1.msra.mxu0 0.0
    %664 = vmatprep.subr.mxu0 0.0
    %665 = vmatpush1.msra.mxu0 0.0
    %666 = vmatprep.subr.mxu0 0.0
    %667 = vmatpush1.msra.mxu0 0.0
    %668 = vmatprep.subr.mxu0 0.0
    %669 = vmatpush1.msra.mxu0 0.0
    %670 = vmatprep.subr.mxu0 0.0
    %671 = vmatpush1.msra.mxu0 0.0
    %672 = vmatprep.subr.mxu0 0.0
    %673 = vmatpush1.msra.mxu0 0.0
    %674 = vmatprep.subr.mxu0 0.0
    %675 = vmatpush1.msra.mxu0 0.0
    %676 = vmatprep.subr.mxu0 0.0
    %677 = vmatpush1.msra.mxu0 0.0
    %678 = vmatprep.subr.mxu0 0.0
    %679 = vmatpush1.msra.mxu0 0.0
    %680 = vmatprep.subr.mxu0 0.0
    %681 = vmatpush1.msra.mxu0 0.0
    %682 = vmatprep.subr.mxu0 0.0
    %683 = vmatpush1.msra.mxu0 0.0
    %684 = vmatprep.subr.mxu0 0.0
    %685 = vmatpush1.msra.mxu0 0.0
    %686 = vmatprep.subr.mxu0 0.0
    %687 = vmatpush1.msra.mxu0 0.0
    %688 = vmatprep.subr.mxu0 0.0
    %689 = vmatpush1.msra.mxu0 0.0
    %690 = vmatprep.subr.mxu0 0.0
    %691 = vmatpush1.msra.mxu0 0.0
    %692 = vmatprep.subr.mxu0 0.0
    %693 = vmatpush1.msra.mxu0 0.0
    %694 = vmatprep.subr.mxu0 0.0
    %695 = vmatpush1.msra.mxu0 0.0
    %696 = vmatprep.subr.mxu0 0.0
    %697 = vmatpush1.msra.mxu0 0.0
    %698 = vmatprep.subr.mxu0 0.0
    %699 = vmatpush1.msra.mxu0 0.0
    %700 = vmatprep.subr.mxu0 0.0
    %701 = vmatpush1.msra.mxu0 0.0
    %702 = vmatprep.subr.mxu0 0.0
    %703 = vmatpush1.msra.mxu0 0.0
    %704 = vmatprep.mubr.f32.mxu0 0.0
    %705 = vmatmul.mubr.f32.gmra.mrb[0].mxu0 %v638
    %v706 = vpop.f32.mrb[0].mxu0
    %v707 = vadd.f32 0.0, %v706
    %v708 = vpop.f32.mrb[0].mxu0
    %709 = vdwg.mxu0
    %v710 = vsel %vm287, %v345, 0
    %712 = vmatprep.subr.mxu0 0.0
    %713 = vmatpush1.msra.mxu0 %v57
    %714 = vmatprep.subr.mxu0 0.0
    %715 = vmatpush1.msra.mxu0 0.0
    %716 = vmatprep.subr.mxu0 0.0
    %717 = vmatpush1.msra.mxu0 0.0
    %718 = vmatprep.subr.mxu0 0.0
    %719 = vmatpush1.msra.mxu0 0.0
    %720 = vmatprep.subr.mxu0 0.0
    %721 = vmatpush1.msra.mxu0 0.0
    %722 = vmatprep.subr.mxu0 0.0
    %723 = vmatpush1.msra.mxu0 0.0
    %724 = vmatprep.subr.mxu0 0.0
    %725 = vmatpush1.msra.mxu0 0.0
    %726 = vmatprep.subr.mxu0 0.0
    %727 = vmatpush1.msra.mxu0 0.0
    %728 = vmatprep.subr.mxu0 0.0
    %729 = vmatpush1.msra.mxu0 0.0
    %730 = vmatprep.subr.mxu0 0.0
    %731 = vmatpush1.msra.mxu0 0.0
    %732 = vmatprep.subr.mxu0 0.0
    %733 = vmatpush1.msra.mxu0 0.0
    %734 = vmatprep.subr.mxu0 0.0
    %735 = vmatpush1.msra.mxu0 0.0
    %736 = vmatprep.subr.mxu0 0.0
    %737 = vmatpush1.msra.mxu0 0.0
    %738 = vmatprep.subr.mxu0 0.0
    %739 = vmatpush1.msra.mxu0 0.0
    %740 = vmatprep.subr.mxu0 0.0
    %741 = vmatpush1.msra.mxu0 0.0
    %742 = vmatprep.subr.mxu0 0.0
    %743 = vmatpush1.msra.mxu0 0.0
    %744 = vmatprep.subr.mxu0 0.0
    %745 = vmatpush1.msra.mxu0 0.0
    %746 = vmatprep.subr.mxu0 0.0
    %747 = vmatpush1.msra.mxu0 0.0
    %748 = vmatprep.subr.mxu0 0.0
    %749 = vmatpush1.msra.mxu0 0.0
    %750 = vmatprep.subr.mxu0 0.0
    %751 = vmatpush1.msra.mxu0 0.0
    %752 = vmatprep.subr.mxu0 0.0
    %753 = vmatpush1.msra.mxu0 0.0
    %754 = vmatprep.subr.mxu0 0.0
    %755 = vmatpush1.msra.mxu0 0.0
    %756 = vmatprep.subr.mxu0 0.0
    %757 = vmatpush1.msra.mxu0 0.0
    %758 = vmatprep.subr.mxu0 0.0
    %759 = vmatpush1.msra.mxu0 0.0
    %760 = vmatprep.subr.mxu0 0.0
    %761 = vmatpush1.msra.mxu0 0.0
    %762 = vmatprep.subr.mxu0 0.0
    %763 = vmatpush1.msra.mxu0 0.0
    %764 = vmatprep.subr.mxu0 0.0
    %765 = vmatpush1.msra.mxu0 0.0
    %766 = vmatprep.subr.mxu0 0.0
    %767 = vmatpush1.msra.mxu0 0.0
    %768 = vmatprep.subr.mxu0 0.0
    %769 = vmatpush1.msra.mxu0 0.0
    %770 = vmatprep.subr.mxu0 0.0
    %771 = vmatpush1.msra.mxu0 0.0
    %772 = vmatprep.subr.mxu0 0.0
    %773 = vmatpush1.msra.mxu0 0.0
    %774 = vmatprep.subr.mxu0 0.0
    %775 = vmatpush1.msra.mxu0 0.0
    %776 = vmatprep.mubr.f32.mxu0 0.0
    %777 = vmatmul.mubr.f32.gmra.mrb[0].mxu0 %v710
    %v778 = vpop.f32.mrb[0].mxu0
    %v779 = vadd.f32 0.0, %v778
    %v780 = vpop.f32.mrb[0].mxu0
    %781 = vdwg.mxu0
    %v782 = vsel %vm287, %v347, 0
    %784 = vmatprep.subr.mxu0 0.0
    %785 = vmatpush1.msra.mxu0 %v58
    %786 = vmatprep.subr.mxu0 0.0
    %787 = vmatpush1.msra.mxu0 0.0
    %788 = vmatprep.subr.mxu0 0.0
    %789 = vmatpush1.msra.mxu0 0.0
    %790 = vmatprep.subr.mxu0 0.0
    %791 = vmatpush1.msra.mxu0 0.0
    %792 = vmatprep.subr.mxu0 0.0
    %793 = vmatpush1.msra.mxu0 0.0
    %794 = vmatprep.subr.mxu0 0.0
    %795 = vmatpush1.msra.mxu0 0.0
    %796 = vmatprep.subr.mxu0 0.0
    %797 = vmatpush1.msra.mxu0 0.0
    %798 = vmatprep.subr.mxu0 0.0
    %799 = vmatpush1.msra.mxu0 0.0
    %800 = vmatprep.subr.mxu0 0.0
    %801 = vmatpush1.msra.mxu0 0.0
    %802 = vmatprep.subr.mxu0 0.0
    %803 = vmatpush1.msra.mxu0 0.0
    %804 = vmatprep.subr.mxu0 0.0
    %805 = vmatpush1.msra.mxu0 0.0
    %806 = vmatprep.subr.mxu0 0.0
    %807 = vmatpush1.msra.mxu0 0.0
    %808 = vmatprep.subr.mxu0 0.0
    %809 = vmatpush1.msra.mxu0 0.0
    %810 = vmatprep.subr.mxu0 0.0
    %811 = vmatpush1.msra.mxu0 0.0
    %812 = vmatprep.subr.mxu0 0.0
    %813 = vmatpush1.msra.mxu0 0.0
    %814 = vmatprep.subr.mxu0 0.0
    %815 = vmatpush1.msra.mxu0 0.0
    %816 = vmatprep.subr.mxu0 0.0
    %817 = vmatpush1.msra.mxu0 0.0
    %818 = vmatprep.subr.mxu0 0.0
    %819 = vmatpush1.msra.mxu0 0.0
    %820 = vmatprep.subr.mxu0 0.0
    %821 = vmatpush1.msra.mxu0 0.0
    %822 = vmatprep.subr.mxu0 0.0
    %823 = vmatpush1.msra.mxu0 0.0
    %824 = vmatprep.subr.mxu0 0.0
    %825 = vmatpush1.msra.mxu0 0.0
    %826 = vmatprep.subr.mxu0 0.0
    %827 = vmatpush1.msra.mxu0 0.0
    %828 = vmatprep.subr.mxu0 0.0
    %829 = vmatpush1.msra.mxu0 0.0
    %830 = vmatprep.subr.mxu0 0.0
    %831 = vmatpush1.msra.mxu0 0.0
    %832 = vmatprep.subr.mxu0 0.0
    %833 = vmatpush1.msra.mxu0 0.0
    %834 = vmatprep.subr.mxu0 0.0
    %835 = vmatpush1.msra.mxu0 0.0
    %836 = vmatprep.subr.mxu0 0.0
    %837 = vmatpush1.msra.mxu0 0.0
    %838 = vmatprep.subr.mxu0 0.0
    %839 = vmatpush1.msra.mxu0 0.0
    %840 = vmatprep.subr.mxu0 0.0
    %841 = vmatpush1.msra.mxu0 0.0
    %842 = vmatprep.subr.mxu0 0.0
    %843 = vmatpush1.msra.mxu0 0.0
    %844 = vmatprep.subr.mxu0 0.0
    %845 = vmatpush1.msra.mxu0 0.0
    %846 = vmatprep.subr.mxu0 0.0
    %847 = vmatpush1.msra.mxu0 0.0
    %848 = vmatprep.mubr.f32.mxu0 0.0
    %849 = vmatmul.mubr.f32.gmra.mrb[0].mxu0 %v782
    %v850 = vpop.f32.mrb[0].mxu0
    %v851 = vadd.f32 0.0, %v850
    %v852 = vpop.f32.mrb[0].mxu0
    %853 = vdwg.mxu0
    %v854 = vsel %vm287, %v349, 0
    %856 = vmatprep.subr.mxu0 0.0
    %857 = vmatpush1.msra.mxu0 %v59
    %858 = vmatprep.subr.mxu0 0.0
    %859 = vmatpush1.msra.mxu0 0.0
    %860 = vmatprep.subr.mxu0 0.0
    %861 = vmatpush1.msra.mxu0 0.0
    %862 = vmatprep.subr.mxu0 0.0
    %863 = vmatpush1.msra.mxu0 0.0
    %864 = vmatprep.subr.mxu0 0.0
    %865 = vmatpush1.msra.mxu0 0.0
    %866 = vmatprep.subr.mxu0 0.0
    %867 = vmatpush1.msra.mxu0 0.0
    %868 = vmatprep.subr.mxu0 0.0
    %869 = vmatpush1.msra.mxu0 0.0
    %870 = vmatprep.subr.mxu0 0.0
    %871 = vmatpush1.msra.mxu0 0.0
    %872 = vmatprep.subr.mxu0 0.0
    %873 = vmatpush1.msra.mxu0 0.0
    %874 = vmatprep.subr.mxu0 0.0
    %875 = vmatpush1.msra.mxu0 0.0
    %876 = vmatprep.subr.mxu0 0.0
    %877 = vmatpush1.msra.mxu0 0.0
    %878 = vmatprep.subr.mxu0 0.0
    %879 = vmatpush1.msra.mxu0 0.0
    %880 = vmatprep.subr.mxu0 0.0
    %881 = vmatpush1.msra.mxu0 0.0
    %882 = vmatprep.subr.mxu0 0.0
    %883 = vmatpush1.msra.mxu0 0.0
    %884 = vmatprep.subr.mxu0 0.0
    %885 = vmatpush1.msra.mxu0 0.0
    %886 = vmatprep.subr.mxu0 0.0
    %887 = vmatpush1.msra.mxu0 0.0
    %888 = vmatprep.subr.mxu0 0.0
    %889 = vmatpush1.msra.mxu0 0.0
    %890 = vmatprep.subr.mxu0 0.0
    %891 = vmatpush1.msra.mxu0 0.0
    %892 = vmatprep.subr.mxu0 0.0
    %893 = vmatpush1.msra.mxu0 0.0
    %894 = vmatprep.subr.mxu0 0.0
    %895 = vmatpush1.msra.mxu0 0.0
    %896 = vmatprep.subr.mxu0 0.0
    %897 = vmatpush1.msra.mxu0 0.0
    %898 = vmatprep.subr.mxu0 0.0
    %899 = vmatpush1.msra.mxu0 0.0
    %900 = vmatprep.subr.mxu0 0.0
    %901 = vmatpush1.msra.mxu0 0.0
    %902 = vmatprep.subr.mxu0 0.0
    %903 = vmatpush1.msra.mxu0 0.0
    %904 = vmatprep.subr.mxu0 0.0
    %905 = vmatpush1.msra.mxu0 0.0
    %906 = vmatprep.subr.mxu0 0.0
    %907 = vmatpush1.msra.mxu0 0.0
    %908 = vmatprep.subr.mxu0 0.0
    %909 = vmatpush1.msra.mxu0 0.0
    %910 = vmatprep.subr.mxu0 0.0
    %911 = vmatpush1.msra.mxu0 0.0
    %912 = vmatprep.subr.mxu0 0.0
    %913 = vmatpush1.msra.mxu0 0.0
    %914 = vmatprep.subr.mxu0 0.0
    %915 = vmatpush1.msra.mxu0 0.0
    %916 = vmatprep.subr.mxu0 0.0
    %917 = vmatpush1.msra.mxu0 0.0
    %918 = vmatprep.subr.mxu0 0.0
    %919 = vmatpush1.msra.mxu0 0.0
    %920 = vmatprep.mubr.f32.mxu0 0.0
    %921 = vmatmul.mubr.f32.gmra.mrb[0].mxu0 %v854
    %v922 = vpop.f32.mrb[0].mxu0
    %v923 = vadd.f32 0.0, %v922
    %v924 = vpop.f32.mrb[0].mxu0
    %925 = vdwg.mxu0
    %v934 = vrot.slane %v491, 7
    %v935 = vsel %vm271, %v934, %v419
    %v936 = vrot.slane %v563, 6
    %v937 = vsel %vm273, %v936, %v935
    %v938 = vrot.slane %v635, 5
    %v939 = vsel %vm275, %v938, %v937
    %v940 = vrot.slane %v707, 4
    %v941 = vsel %vm277, %v940, %v939
    %v942 = vrot.slane %v779, 3
    %v943 = vsel %vm279, %v942, %v941
    %v944 = vrot.slane %v851, 2
    %v945 = vsel %vm281, %v944, %v943
    %v946 = vrot.slane %v923, 1
    %v947 = vsel %vm283, %v946, %v945
    %949 = vst [vmem:[#allocation7] sm:$0xff] %v947
    // Predicated region
    $region30: #{tpu_custom_call.1} parent=1 // pred_check
      _
    $region31: #{tpu_custom_call.1} parent=1 // pred_check_branch
      %951 = sbr.rel (0) target = $region33
    $region32: #{tpu_custom_call.1} parent=1 // pred_region
      %s953 = ssub.s32 128, 128
      %954 = vsyncadd [#allocation4], %s953
      %s956 = sshll.u32 [#allocation7], 4
      %s957 = int_to_ptr.vmem [resolvable:$true] %s956
      %959 = dma.vmem_to_hbm [thread:$0]  %s957, 128, %s5, [#allocation4]
    $region33: #{tpu_custom_call.1} parent=1 // pred_fallthru
      _
    // Predicated region
    $region34: #{tpu_custom_call.1} parent=1 // pred_check
      _
    $region35: #{tpu_custom_call.1} parent=1 // pred_check_branch
      %961 = sbr.rel (0) target = $region37
    $region36: #{tpu_custom_call.1} parent=1 // pred_region
      %s963 = ssub.s32 128, 128
      %964 = vsyncadd [#allocation9], %s963
      %s966 = sshll.u32 [#allocation8], 4
      %s967 = int_to_ptr.vmem [resolvable:$true] %s966
      %969 = dma.vmem_to_hbm [thread:$0]  %s967, 128, %s6, [#allocation9]
    $region37: #{tpu_custom_call.1} parent=1 // pred_fallthru
      _
    // Predicated region
    $region38: #{tpu_custom_call.1} parent=1 // pred_check
      _
    $region39: #{tpu_custom_call.1} parent=1 // pred_check_branch
      %971 = sbr.rel (0) target = $region41
    $region40: #{tpu_custom_call.1} parent=1 // pred_region
      %972 = dma.done [#allocation4], 128
    $region41: #{tpu_custom_call.1} parent=1 // pred_fallthru
      _
    // Predicated region
    $region42: #{tpu_custom_call.1} parent=1 // pred_check
      _
    $region43: #{tpu_custom_call.1} parent=1 // pred_check_branch
      %974 = sbr.rel (0) target = $region45
    $region44: #{tpu_custom_call.1} parent=1 // pred_region
      %975 = dma.done [#allocation9], 128
    $region45: #{tpu_custom_call.1} parent=1 // pred_fallthru
      _
    %976 = vsyncpa [#allocation3], 1
    %977 = vsyncpa [#allocation6], 1
    %978 = vsyncpa [#allocation4], 1
    %979 = vsyncpa [#allocation9], 1

</llo_original>
